<compile_context>
chip_gen: v7x
topology: tpu7x:2x2x1
jax: 0.10.0
libtpu: 0.0.40
codegen_flags: <defaults>
</compile_context>

<pallas_src>
import jax
import jax.numpy as jnp
from jax.experimental import pallas as pl
from jax.experimental.pallas import tpu as pltpu

INPUT_SIZE = 300
HIDDEN_SIZE = 64
OUTPUT_SIZE = 2


def _round_up(n, m):
    return ((n + m - 1) // m) * m


def mlp_kernel(x_ref, w1_ref, b1_ref, w2_ref, b2_ref, o_ref):
    # fc1 on the MXU with f32 accumulation; bias + ReLU on the VPU.
    h = jnp.dot(x_ref[...], w1_ref[...], preferred_element_type=jnp.float32)
    h = jnp.maximum(h + b1_ref[...], 0.0)
    # fc2 is tiny (64 -> 2); stays f32.
    y = jnp.dot(h, w2_ref[...], preferred_element_type=jnp.float32)
    o_ref[...] = (y + b2_ref[...]).astype(o_ref.dtype)


def simple_nn_forward(x, w1, b1, w2, b2, *, tb=2048, core_parallel=False,
                      x_buffers=2, vmem_limit_bytes=32 * 1024 * 1024):
    """Forward pass of SimpleNNModel.

    x: (B, 300) f32; w1: (300, 64); b1: (1, 64); w2: (64, 2); b2: (1, 2).

    tb:            batch tile; sweep 2048-4096 (v7x likes the largest).
    core_parallel: set True on v7x to shard the batch grid across both TCs.
    x_buffers:     set 3 on v5e for deeper buffering of the x stream.
    """
    B = x.shape[0]

    # Batch tile: multiple of 8 (sublane) unless it equals the full batch
    # (a block equal to the full array extent is always legal). No HBM-side
    # padding of x is ever performed.
    tb = min(tb, B)
    if tb != B and tb % 8 != 0:
        tb = _round_up(tb, 8)

    grid = (pl.cdiv(B, tb),)

    flops = (2 * B * INPUT_SIZE * HIDDEN_SIZE
             + 2 * B * HIDDEN_SIZE * OUTPUT_SIZE)
    bytes_accessed = (
        B * INPUT_SIZE * 4                # x (f32, read once, no extra pass)
        + INPUT_SIZE * HIDDEN_SIZE * 4    # w1
        + HIDDEN_SIZE * 4                 # b1
        + HIDDEN_SIZE * OUTPUT_SIZE * 4   # w2
        + OUTPUT_SIZE * 4                 # b2
        + B * OUTPUT_SIZE * 4             # output
    )

    # Streamed batch tile of x (the only large HBM stream).
    if x_buffers != 2:
        x_spec = pl.BlockSpec((tb, INPUT_SIZE), lambda i: (i, 0),
                              pipeline_mode=pl.Buffered(x_buffers))
    else:
        x_spec = pl.BlockSpec((tb, INPUT_SIZE), lambda i: (i, 0))

    dim_sem = (pltpu.CORE_PARALLEL,) if core_parallel else ("parallel",)

    out = pl.pallas_call(
        mlp_kernel,
        out_shape=jax.ShapeDtypeStruct((B, OUTPUT_SIZE), jnp.float32),
        grid_spec=pltpu.PrefetchScalarGridSpec(
            num_scalar_prefetch=0,
            grid=grid,
            in_specs=[
                x_spec,
                # Weights/biases: same block every step -> stay VMEM-resident.
                pl.BlockSpec((INPUT_SIZE, HIDDEN_SIZE), lambda i: (0, 0)),
                pl.BlockSpec((1, HIDDEN_SIZE), lambda i: (0, 0)),
                pl.BlockSpec((HIDDEN_SIZE, OUTPUT_SIZE), lambda i: (0, 0)),
                pl.BlockSpec((1, OUTPUT_SIZE), lambda i: (0, 0)),
            ],
            out_specs=pl.BlockSpec((tb, OUTPUT_SIZE), lambda i: (i, 0)),
        ),
        compiler_params=pltpu.CompilerParams(
            dimension_semantics=dim_sem,
            vmem_limit_bytes=vmem_limit_bytes,
        ),
        cost_estimate=pl.CostEstimate(
            flops=flops, transcendentals=0, bytes_accessed=bytes_accessed
        ),
    )(x, w1, b1, w2, b2)
    return out


def init_params(key):
    # Deterministic init mimicking torch.nn.Linear default:
    # U(-1/sqrt(fan_in), +1/sqrt(fan_in)) for weight and bias.
    k1, k2, k3, k4 = jax.random.split(key, 4)
    bound1 = 1.0 / jnp.sqrt(jnp.float32(INPUT_SIZE))
    bound2 = 1.0 / jnp.sqrt(jnp.float32(HIDDEN_SIZE))
    # Stored as (in_features, out_features) so the kernel does x @ W.
    w1 = jax.random.uniform(k1, (INPUT_SIZE, HIDDEN_SIZE), jnp.float32,
                            minval=-bound1, maxval=bound1)
    b1 = jax.random.uniform(k2, (1, HIDDEN_SIZE), jnp.float32,
                            minval=-bound1, maxval=bound1)
    w2 = jax.random.uniform(k3, (HIDDEN_SIZE, OUTPUT_SIZE), jnp.float32,
                            minval=-bound2, maxval=bound2)
    b2 = jax.random.uniform(k4, (1, OUTPUT_SIZE), jnp.float32,
                            minval=-bound2, maxval=bound2)
    return w1, b1, w2, b2


def reference_forward(x, w1, b1, w2, b2):
    h = jnp.maximum(x @ w1 + b1, 0.0)
    return h @ w2 + b2


if __name__ == "__main__":
    key = jax.random.PRNGKey(0)
    k_x, k_p = jax.random.split(key)

    w1, b1, w2, b2 = init_params(k_p)

    # Case 1: small batch with a small tile so the example exercises a
    # multi-step (pipelined) grid.
    batch = 16
    x = jax.random.normal(k_x, (batch, INPUT_SIZE), jnp.float32)
    out = jax.block_until_ready(simple_nn_forward(x, w1, b1, w2, b2, tb=8))
    assert out.shape == (batch, OUTPUT_SIZE)
    ref = reference_forward(x, w1, b1, w2, b2)
    # Tolerance accounts for MXU vs XLA f32-matmul pass-count differences
    # (both are f32-accumulated; any bf16-input pass differs by O(1e-3)).
    assert jnp.allclose(out, ref, atol=1e-2, rtol=1e-2), "mismatch (even grid)"

    # Case 2: ragged last block (B not a multiple of the tile) -> verifies the
    # no-padding path (boundary DMAs clipped, no extra HBM copy of x).
    batch2 = 13
    x2 = x[:batch2]
    out2 = jax.block_until_ready(simple_nn_forward(x2, w1, b1, w2, b2, tb=8))
    assert out2.shape == (batch2, OUTPUT_SIZE)
    ref2 = reference_forward(x2, w1, b1, w2, b2)
    assert jnp.allclose(out2, ref2, atol=1e-2, rtol=1e-2), "mismatch (ragged grid)"

    print("KERNEL_OK")
</pallas_src>

<mosaic_0001>
module attributes {stable_mosaic.version = 11 : i64} {
  func.func @mlp_kernel(%arg0: i32, %arg1: memref<8x300xf32, #tpu.memory_space<vmem>>, %arg2: memref<300x64xf32, #tpu.memory_space<vmem>>, %arg3: memref<1x64xf32, #tpu.memory_space<vmem>>, %arg4: memref<64x2xf32, #tpu.memory_space<vmem>>, %arg5: memref<1x2xf32, #tpu.memory_space<vmem>>, %arg6: memref<8x2xf32, #tpu.memory_space<vmem>>) attributes {dimension_semantics = [#tpu.dimension_semantics<parallel>], iteration_bounds = array<i64: 2>, scalar_prefetch = 0 : i64, scratch_operands = 0 : i64, tpu.core_type = #tpu.core_type<tc>, window_params = [{transform_indices = @transform_0, window_bounds = array<i64: 8, 300>}, {pipeline_mode = #tpu.pipeline_mode<synchronous>, transform_indices = @transform_1, window_bounds = array<i64: 300, 64>}, {pipeline_mode = #tpu.pipeline_mode<synchronous>, transform_indices = @transform_2, window_bounds = array<i64: 1, 64>}, {pipeline_mode = #tpu.pipeline_mode<synchronous>, transform_indices = @transform_3, window_bounds = array<i64: 64, 2>}, {pipeline_mode = #tpu.pipeline_mode<synchronous>, transform_indices = @transform_4, window_bounds = array<i64: 1, 2>}, {transform_indices = @transform_5, window_bounds = array<i64: 8, 2>}]} {
    %c0 = arith.constant 0 : index
    %c0_0 = arith.constant 0 : index
    %0 = vector.load %arg1[%c0, %c0_0] : memref<8x300xf32, #tpu.memory_space<vmem>>, vector<8x300xf32>
    %c0_1 = arith.constant 0 : index
    %c0_2 = arith.constant 0 : index
    %1 = vector.load %arg2[%c0_1, %c0_2] : memref<300x64xf32, #tpu.memory_space<vmem>>, vector<300x64xf32>
    %cst = arith.constant dense<0.000000e+00> : vector<8x64xf32>
    %2 = tpu.matmul %0, %1, %cst {dimension_numbers = #tpu.dot_dimension_numbers<[1], [0], [0], [1], [0, 0, 1, 1], [], []>} : vector<8x300xf32>, vector<300x64xf32>, vector<8x64xf32> -> vector<8x64xf32>
    %c0_3 = arith.constant 0 : index
    %c0_4 = arith.constant 0 : index
    %3 = vector.load %arg3[%c0_3, %c0_4] : memref<1x64xf32, #tpu.memory_space<vmem>>, vector<1x64xf32>
    %4 = vector.broadcast %3 : vector<1x64xf32> to vector<8x64xf32>
    %5 = arith.addf %2, %4 : vector<8x64xf32>
    %cst_5 = arith.constant 0.000000e+00 : f32
    %6 = vector.broadcast %cst_5 : f32 to vector<8x64xf32>
    %7 = arith.maximumf %5, %6 : vector<8x64xf32>
    %c0_6 = arith.constant 0 : index
    %c0_7 = arith.constant 0 : index
    %8 = vector.load %arg4[%c0_6, %c0_7] : memref<64x2xf32, #tpu.memory_space<vmem>>, vector<64x2xf32>
    %cst_8 = arith.constant dense<0.000000e+00> : vector<8x2xf32>
    %9 = tpu.matmul %7, %8, %cst_8 {dimension_numbers = #tpu.dot_dimension_numbers<[1], [0], [0], [1], [0, 0, 1, 1], [], []>} : vector<8x64xf32>, vector<64x2xf32>, vector<8x2xf32> -> vector<8x2xf32>
    %c0_9 = arith.constant 0 : index
    %c0_10 = arith.constant 0 : index
    %10 = vector.load %arg5[%c0_9, %c0_10] : memref<1x2xf32, #tpu.memory_space<vmem>>, vector<1x2xf32>
    %11 = vector.broadcast %10 : vector<1x2xf32> to vector<8x2xf32>
    %12 = arith.addf %9, %11 : vector<8x2xf32>
    %c0_11 = arith.constant 0 : index
    %c0_12 = arith.constant 0 : index
    %13 = vector.load %arg6[%c0_11, %c0_12] : memref<8x2xf32, #tpu.memory_space<vmem>>, vector<8x2xf32>
    tpu.vector_store %arg6[%c0_11, %c0_12], %12 {strides = array<i32>} : memref<8x2xf32, #tpu.memory_space<vmem>>, vector<8x2xf32>,
    return
  }
  func.func @transform_0(%arg0: i32) -> (i32, i32) {
    %c0_i32 = arith.constant 0 : i32
    %c0_i32_0 = arith.constant 0 : i32
    return %arg0, %c0_i32 : i32, i32
  }
  func.func @transform_1(%arg0: i32) -> (i32, i32) {
    %c0_i32 = arith.constant 0 : i32
    %c0_i32_0 = arith.constant 0 : i32
    %c0_i32_1 = arith.constant 0 : i32
    return %c0_i32, %c0_i32_0 : i32, i32
  }
  func.func @transform_2(%arg0: i32) -> (i32, i32) {
    %c0_i32 = arith.constant 0 : i32
    %c0_i32_0 = arith.constant 0 : i32
    %c0_i32_1 = arith.constant 0 : i32
    return %c0_i32, %c0_i32_0 : i32, i32
  }
  func.func @transform_3(%arg0: i32) -> (i32, i32) {
    %c0_i32 = arith.constant 0 : i32
    %c0_i32_0 = arith.constant 0 : i32
    %c0_i32_1 = arith.constant 0 : i32
    return %c0_i32, %c0_i32_0 : i32, i32
  }
  func.func @transform_4(%arg0: i32) -> (i32, i32) {
    %c0_i32 = arith.constant 0 : i32
    %c0_i32_0 = arith.constant 0 : i32
    %c0_i32_1 = arith.constant 0 : i32
    return %c0_i32, %c0_i32_0 : i32, i32
  }
  func.func @transform_5(%arg0: i32) -> (i32, i32) {
    %c0_i32 = arith.constant 0 : i32
    %c0_i32_0 = arith.constant 0 : i32
    return %arg0, %c0_i32 : i32, i32
  }
}

</mosaic_0001>

<llo_original>
// kernel: tpu_custom_call.1
$region0: #{tpu_custom_call.1}
  #allocation0 [shape = 'u32[]', space=smem, size = 0x4, offset = 0x4, fixed_abs, tag = 'smem constant byte address 0x4 - core index']
  #allocation1 [shape = 'u32[144,128]{1,0:T(1,128)}', space=vmem, size = 0x12000, scoped, tag = 'internal scratch']
  %s0 = inlined_call_operand.vmem [shape: f32[16,300], index: 0, kind: input, shape index: {}]
  %s1 = inlined_call_operand.vmem [shape: f32[300,64], index: 1, kind: input, shape index: {}]
  %s2 = inlined_call_operand.vmem [shape: f32[1,64], index: 2, kind: input, shape index: {}]
  %s3 = inlined_call_operand.vmem [shape: f32[64,2], index: 3, kind: input, shape index: {}]
  %s4 = inlined_call_operand.vmem [shape: f32[1,2], index: 4, kind: input, shape index: {}]
  %s5 = inlined_call_operand.vmem [shape: f32[16,2], index: 5, kind: output, shape index: {}]
  %s6 = sld [smem:[#allocation0]]
  $region53: #{tpu_custom_call.1} parent=0
    _
  %s8 = ssub.s32 1, %s6
  %s9 = scalar_select 0, %s8, %s6
  loop: start=0, step=1, limit=4
  $region2: #{tpu_custom_call.1} parent=0 // loop_pre_header
    _
  $region3: #{tpu_custom_call.1} parent=0 // loop_header
    %s11 = sphi 0, %s15
    %p12 = scmp.ge.s32.totalorder %s11, 4
    %s21 = sphi 0, %s23
    %s24 = sphi 0, %s21
    %s25 = sphi 0, %s24
    %s41 = sphi 0, %s25
    %s45 = sphi 0, %s45
    %s47 = sphi 0, %s45
    %s48 = sphi 0, %s47
    %s62 = sphi 0, %s48
    %s66 = sphi 0, %s66
    %s68 = sphi 0, %s66
    %s69 = sphi 0, %s68
    %s83 = sphi 0, %s69
    %s87 = sphi 0, %s87
    %s89 = sphi 0, %s87
    %s90 = sphi 0, %s89
    %s104 = sphi 0, %s90
    %s108 = sphi 0, %s108
    %s110 = sphi 0, %s108
    %s111 = sphi 0, %s110
    %s125 = sphi 0, %s111
    %s131 = sphi 0, %s133
    %s134 = sphi 0, %s131
    %s135 = sphi 0, %s134
    %s151 = sphi 0, %s135
  $region4: #{tpu_custom_call.1} parent=0 // loop_header_branch
    %14 = sbr.rel (%p12) target = $region8
  $region5: #{tpu_custom_call.1} parent=0 // loop_body
    %s16 = ssub.s32 %s11, 1
    %s17 = ssub.s32 %s11, 2
    %s18 = sadd.s32 %s11, 1
    %s19 = ssub.s32 %s11, %s18
    %p20 = scmp.eq.s32.totalorder %s19, 0
    %s22 = sadd.s32 %s21, 1
    %s23 = scalar_select %p20, %s21, %s22
    %p26 = pneg %p20
    %p27 = scmp.eq.s32.totalorder %s11, 1
    %p28 = por %p26, %p27
    %p29 = scmp.ne.s32.totalorder %s21, %s24
    %p30 = scmp.eq.s32.totalorder %s11, 0
    %p31 = por %p29, %p30
    %p32 = scmp.ne.s32.totalorder %s21, %s24
    %p33 = scmp.eq.s32.totalorder %s16, 1
    %p34 = por %p32, %p33
    %p35 = scmp.ne.s32.totalorder %s24, %s25
    %p36 = scmp.eq.s32.totalorder %s16, 0
    %p37 = por %p35, %p36
    %p38 = scmp.ne.s32.totalorder %s24, %s25
    %p39 = scmp.eq.s32.totalorder %s17, 1
    %p40 = por %p38, %p39
    %p42 = scmp.ne.s32.totalorder %s25, %s41
    %p43 = scmp.eq.s32.totalorder %s17, 0
    %p44 = por %p42, %p43
    %s46 = sadd.s32 %s45, 1
    %p49 = scmp.eq.s32.totalorder %s11, 1
    %p50 = scmp.ne.s32.totalorder %s45, %s47
    %p51 = scmp.eq.s32.totalorder %s11, 0
    %p52 = por %p50, %p51
    %p53 = scmp.ne.s32.totalorder %s45, %s47
    %p54 = scmp.eq.s32.totalorder %s16, 1
    %p55 = por %p53, %p54
    %p56 = scmp.ne.s32.totalorder %s47, %s48
    %p57 = scmp.eq.s32.totalorder %s16, 0
    %p58 = por %p56, %p57
    %p59 = scmp.ne.s32.totalorder %s47, %s48
    %p60 = scmp.eq.s32.totalorder %s17, 1
    %p61 = por %p59, %p60
    %p63 = scmp.ne.s32.totalorder %s48, %s62
    %p64 = scmp.eq.s32.totalorder %s17, 0
    %p65 = por %p63, %p64
    %s67 = sadd.s32 %s66, 1
    %p70 = scmp.eq.s32.totalorder %s11, 1
    %p71 = scmp.ne.s32.totalorder %s66, %s68
    %p72 = scmp.eq.s32.totalorder %s11, 0
    %p73 = por %p71, %p72
    %p74 = scmp.ne.s32.totalorder %s66, %s68
    %p75 = scmp.eq.s32.totalorder %s16, 1
    %p76 = por %p74, %p75
    %p77 = scmp.ne.s32.totalorder %s68, %s69
    %p78 = scmp.eq.s32.totalorder %s16, 0
    %p79 = por %p77, %p78
    %p80 = scmp.ne.s32.totalorder %s68, %s69
    %p81 = scmp.eq.s32.totalorder %s17, 1
    %p82 = por %p80, %p81
    %p84 = scmp.ne.s32.totalorder %s69, %s83
    %p85 = scmp.eq.s32.totalorder %s17, 0
    %p86 = por %p84, %p85
    %s88 = sadd.s32 %s87, 1
    %p91 = scmp.eq.s32.totalorder %s11, 1
    %p92 = scmp.ne.s32.totalorder %s87, %s89
    %p93 = scmp.eq.s32.totalorder %s11, 0
    %p94 = por %p92, %p93
    %p95 = scmp.ne.s32.totalorder %s87, %s89
    %p96 = scmp.eq.s32.totalorder %s16, 1
    %p97 = por %p95, %p96
    %p98 = scmp.ne.s32.totalorder %s89, %s90
    %p99 = scmp.eq.s32.totalorder %s16, 0
    %p100 = por %p98, %p99
    %p101 = scmp.ne.s32.totalorder %s89, %s90
    %p102 = scmp.eq.s32.totalorder %s17, 1
    %p103 = por %p101, %p102
    %p105 = scmp.ne.s32.totalorder %s90, %s104
    %p106 = scmp.eq.s32.totalorder %s17, 0
    %p107 = por %p105, %p106
    %s109 = sadd.s32 %s108, 1
    %p112 = scmp.eq.s32.totalorder %s11, 1
    %p113 = scmp.ne.s32.totalorder %s108, %s110
    %p114 = scmp.eq.s32.totalorder %s11, 0
    %p115 = por %p113, %p114
    %p116 = scmp.ne.s32.totalorder %s108, %s110
    %p117 = scmp.eq.s32.totalorder %s16, 1
    %p118 = por %p116, %p117
    %p119 = scmp.ne.s32.totalorder %s110, %s111
    %p120 = scmp.eq.s32.totalorder %s16, 0
    %p121 = por %p119, %p120
    %p122 = scmp.ne.s32.totalorder %s110, %s111
    %p123 = scmp.eq.s32.totalorder %s17, 1
    %p124 = por %p122, %p123
    %p126 = scmp.ne.s32.totalorder %s111, %s125
    %p127 = scmp.eq.s32.totalorder %s17, 0
    %p128 = por %p126, %p127
    %s129 = ssub.s32 %s11, %s18
    %p130 = scmp.eq.s32.totalorder %s129, 0
    %s132 = sadd.s32 %s131, 1
    %s133 = scalar_select %p130, %s131, %s132
    %p136 = pneg %p130
    %p137 = scmp.eq.s32.totalorder %s11, 1
    %p138 = por %p136, %p137
    %p139 = scmp.ne.s32.totalorder %s131, %s134
    %p140 = scmp.eq.s32.totalorder %s11, 0
    %p141 = por %p139, %p140
    %p142 = scmp.ne.s32.totalorder %s131, %s134
    %p143 = scmp.eq.s32.totalorder %s16, 1
    %p144 = por %p142, %p143
    %p145 = scmp.ne.s32.totalorder %s134, %s135
    %p146 = scmp.eq.s32.totalorder %s16, 0
    %p147 = por %p145, %p146
    %p148 = scmp.ne.s32.totalorder %s134, %s135
    %p149 = scmp.eq.s32.totalorder %s17, 1
    %p150 = por %p148, %p149
    %p152 = scmp.ne.s32.totalorder %s135, %s151
    %p153 = scmp.eq.s32.totalorder %s17, 0
    %p154 = por %p152, %p153
    %p155 = scmp.le.s32.totalorder 1, %s11
    %p156 = scmp.lt.s32.totalorder %s11, 3
    %p157 = pnand %p155, %p156
    %p158 = pneg %p157
    // Predicated region
    $region9: #{tpu_custom_call.1} parent=5 // pred_check
      _
    $region10: #{tpu_custom_call.1} parent=5 // pred_check_branch
      %160 = sbr.rel (%p157) target = $region12
    $region11: #{tpu_custom_call.1} parent=5 // pred_region
      %s161 = ssub.s32 %s11, 1
      // Predicated region
      $region13: #{tpu_custom_call.1} parent=11 // pred_check
        %p162 = pneg %p58
      $region14: #{tpu_custom_call.1} parent=11 // pred_check_branch
        %164 = sbr.rel (%p162) target = $region16
      $region15: #{tpu_custom_call.1} parent=11 // pred_region
        _
      $region16: #{tpu_custom_call.1} parent=11 // pred_fallthru
        _
      // Predicated region
      $region17: #{tpu_custom_call.1} parent=11 // pred_check
        %p165 = pneg %p79
      $region18: #{tpu_custom_call.1} parent=11 // pred_check_branch
        %167 = sbr.rel (%p165) target = $region20
      $region19: #{tpu_custom_call.1} parent=11 // pred_region
        _
      $region20: #{tpu_custom_call.1} parent=11 // pred_fallthru
        _
      // Predicated region
      $region21: #{tpu_custom_call.1} parent=11 // pred_check
        %p168 = pneg %p100
      $region22: #{tpu_custom_call.1} parent=11 // pred_check_branch
        %170 = sbr.rel (%p168) target = $region24
      $region23: #{tpu_custom_call.1} parent=11 // pred_region
        _
      $region24: #{tpu_custom_call.1} parent=11 // pred_fallthru
        _
      // Predicated region
      $region25: #{tpu_custom_call.1} parent=11 // pred_check
        %p171 = pneg %p121
      $region26: #{tpu_custom_call.1} parent=11 // pred_check_branch
        %173 = sbr.rel (%p171) target = $region28
      $region27: #{tpu_custom_call.1} parent=11 // pred_region
        _
      $region28: #{tpu_custom_call.1} parent=11 // pred_fallthru
        _
    $region12: #{tpu_custom_call.1} parent=5 // pred_fallthru
      _
    %p174 = scmp.lt.s32.totalorder %s11, 2
    // Predicated region
    $region29: #{tpu_custom_call.1} parent=5 // pred_check
      %p175 = pneg %p174
    $region30: #{tpu_custom_call.1} parent=5 // pred_check_branch
      %177 = sbr.rel (%p175) target = $region32
    $region31: #{tpu_custom_call.1} parent=5 // pred_region
      // Predicated region
      $region33: #{tpu_custom_call.1} parent=31 // pred_check
        %p178 = pneg %p31
      $region34: #{tpu_custom_call.1} parent=31 // pred_check_branch
        %180 = sbr.rel (%p178) target = $region36
      $region35: #{tpu_custom_call.1} parent=31 // pred_region
        %p181 = scmp.lt.s32.totalorder %s11, 1
        %s182 = scalar_select %p181, %s11, 1
        %s183 = smul.addr %s182, 3
        %s184 = smul.addr %s183, 8
        %s185 = scalar_lea.vmem %s0, %s184
      $region36: #{tpu_custom_call.1} parent=31 // pred_fallthru
        _
    $region32: #{tpu_custom_call.1} parent=5 // pred_fallthru
      _
    %p186 = scmp.le.s32.totalorder 1, %s11
    %p187 = scmp.lt.s32.totalorder %s11, 3
    %p188 = pnand %p186, %p187
    %p189 = pneg %p188
    // Predicated region
    $region37: #{tpu_custom_call.1} parent=5 // pred_check
      _
    $region38: #{tpu_custom_call.1} parent=5 // pred_check_branch
      %191 = sbr.rel (%p188) target = $region40
    $region39: #{tpu_custom_call.1} parent=5 // pred_region
      %s192 = ssub.s32 %s11, 1
      %p193 = scmp.lt.s32.totalorder %s16, 1
      %s194 = scalar_select %p193, %s16, 1
      %s195 = smul.addr %s194, 3
      %s196 = smul.addr %s195, 8
      %s197 = scalar_lea.vmem %s0, %s196
      %p198 = pneg %p37
      %p199 = pneg %p34
      %p200 = pneg %p58
      %p201 = pneg %p55
      %p202 = pneg %p79
      %p203 = pneg %p76
      %p204 = pneg %p100
      %p205 = pneg %p97
      %p206 = pneg %p121
      %p207 = pneg %p118
      %p208 = pneg %p147
      %p209 = pneg %p144
      %p210 = scmp.lt.s32.totalorder %s16, 1
      %s211 = scalar_select %p210, %s16, 1
      %s212 = smul.addr %s211, 8
      %s213 = scalar_lea.vmem %s5, %s212
      %p214 = scmp.lt.s32.totalorder %s16, 1
      %s215 = scalar_select %p214, %s16, 1
      %s216 = smul.addr %s215, 3
      %s217 = smul.addr %s216, 8
      %s218 = scalar_lea.vmem %s0, %s217
      %p219 = scmp.lt.s32.totalorder %s16, 1
      %s220 = scalar_select %p219, %s16, 1
      %s221 = smul.addr %s220, 8
      %s222 = scalar_lea.vmem %s5, %s221
      %v223 = vld [vmem:[%s218] sm:$0xff]
      %v224 = vld [vmem:[%s218 + $0x8] sm:$0xff]
      %v225 = vld [vmem:[%s218 + $0x10] sm:$0xff]
      %v226 = vld [vmem:[%s1] sm:$0xff]
      %v227 = vld [vmem:[%s1 + $0x8] sm:$0xff]
      %v228 = vld [vmem:[%s1 + $0x10] sm:$0xff]
      %v229 = vld [vmem:[%s1 + $0x18] sm:$0xff]
      %v230 = vld [vmem:[%s1 + $0x20] sm:$0xff]
      %v231 = vld [vmem:[%s1 + $0x28] sm:$0xff]
      %v232 = vld [vmem:[%s1 + $0x30] sm:$0xff]
      %v233 = vld [vmem:[%s1 + $0x38] sm:$0xff]
      %v234 = vld [vmem:[%s1 + $0x40] sm:$0xff]
      %v235 = vld [vmem:[%s1 + $0x48] sm:$0xff]
      %v236 = vld [vmem:[%s1 + $0x50] sm:$0xff]
      %v237 = vld [vmem:[%s1 + $0x58] sm:$0xff]
      %v238 = vld [vmem:[%s1 + $0x60] sm:$0xff]
      %v239 = vld [vmem:[%s1 + $0x68] sm:$0xff]
      %v240 = vld [vmem:[%s1 + $0x70] sm:$0xff]
      %v241 = vld [vmem:[%s1 + $0x78] sm:$0xff]
      %v242 = vld [vmem:[%s1 + $0x80] sm:$0xff]
      %v243 = vld [vmem:[%s1 + $0x88] sm:$0xff]
      %v244 = vld [vmem:[%s1 + $0x90] sm:$0xff]
      %v245 = vld [vmem:[%s1 + $0x98] sm:$0xff]
      %v246 = vld [vmem:[%s1 + $0xa0] sm:$0xff]
      %v247 = vld [vmem:[%s1 + $0xa8] sm:$0xff]
      %v248 = vld [vmem:[%s1 + $0xb0] sm:$0xff]
      %v249 = vld [vmem:[%s1 + $0xb8] sm:$0xff]
      %v250 = vld [vmem:[%s1 + $0xc0] sm:$0xff]
      %v251 = vld [vmem:[%s1 + $0xc8] sm:$0xff]
      %v252 = vld [vmem:[%s1 + $0xd0] sm:$0xff]
      %v253 = vld [vmem:[%s1 + $0xd8] sm:$0xff]
      %v254 = vld [vmem:[%s1 + $0xe0] sm:$0xff]
      %v255 = vld [vmem:[%s1 + $0xe8] sm:$0xff]
      %v256 = vld [vmem:[%s1 + $0xf0] sm:$0xff]
      %v257 = vld [vmem:[%s1 + $0xf8] sm:$0xff]
      %v258 = vld [vmem:[%s1 + $0x100] sm:$0xff]
      %v259 = vld [vmem:[%s1 + $0x108] sm:$0xff]
      %v260 = vld [vmem:[%s1 + $0x110] sm:$0xff]
      %v261 = vld [vmem:[%s1 + $0x118] sm:$0xff]
      %v262 = vld [vmem:[%s1 + $0x120] sm:$0xff]
      %v263 = vld [vmem:[%s1 + $0x128] sm:$0xf]
      %v264 = vld [vmem:[%s2] sm:$0x1]
      %v266 = vlaneseq
      %v267 = vshrl.u32 %v266, 7
      %v268 = vsub.s32 0, %v267
      %v269 = vrot.slane %v264, %v268
      %vm271 = vcmask 359424
      %v273 = vsel %vm271, %v225, 0
      %vm275 = vcmask 1043456
      %v277 = vsel %vm275, %v263, 0
      %279 = vmatprep.subr.mxu0 0.0
      %280 = vmatpush1.msra.mxu0 %v226
      %281 = vmatprep.subr.mxu0 0.0
      %282 = vmatpush1.msra.mxu0 %v227
      %283 = vmatprep.subr.mxu0 0.0
      %284 = vmatpush1.msra.mxu0 %v228
      %285 = vmatprep.subr.mxu0 0.0
      %286 = vmatpush1.msra.mxu0 %v229
      %287 = vmatprep.subr.mxu0 0.0
      %288 = vmatpush1.msra.mxu0 %v230
      %289 = vmatprep.subr.mxu0 0.0
      %290 = vmatpush1.msra.mxu0 %v231
      %291 = vmatprep.subr.mxu0 0.0
      %292 = vmatpush1.msra.mxu0 %v232
      %293 = vmatprep.subr.mxu0 0.0
      %294 = vmatpush1.msra.mxu0 %v233
      %295 = vmatprep.subr.mxu0 0.0
      %296 = vmatpush1.msra.mxu0 %v234
      %297 = vmatprep.subr.mxu0 0.0
      %298 = vmatpush1.msra.mxu0 %v235
      %299 = vmatprep.subr.mxu0 0.0
      %300 = vmatpush1.msra.mxu0 %v236
      %301 = vmatprep.subr.mxu0 0.0
      %302 = vmatpush1.msra.mxu0 %v237
      %303 = vmatprep.subr.mxu0 0.0
      %304 = vmatpush1.msra.mxu0 %v238
      %305 = vmatprep.subr.mxu0 0.0
      %306 = vmatpush1.msra.mxu0 %v239
      %307 = vmatprep.subr.mxu0 0.0
      %308 = vmatpush1.msra.mxu0 %v240
      %309 = vmatprep.subr.mxu0 0.0
      %310 = vmatpush1.msra.mxu0 %v241
      %311 = vmatprep.subr.mxu0 0.0
      %312 = vmatpush1.msra.mxu0 %v242
      %313 = vmatprep.subr.mxu0 0.0
      %314 = vmatpush1.msra.mxu0 %v243
      %315 = vmatprep.subr.mxu0 0.0
      %316 = vmatpush1.msra.mxu0 %v244
      %317 = vmatprep.subr.mxu0 0.0
      %318 = vmatpush1.msra.mxu0 %v245
      %319 = vmatprep.subr.mxu0 0.0
      %320 = vmatpush1.msra.mxu0 %v246
      %321 = vmatprep.subr.mxu0 0.0
      %322 = vmatpush1.msra.mxu0 %v247
      %323 = vmatprep.subr.mxu0 0.0
      %324 = vmatpush1.msra.mxu0 %v248
      %325 = vmatprep.subr.mxu0 0.0
      %326 = vmatpush1.msra.mxu0 %v249
      %327 = vmatprep.subr.mxu0 0.0
      %328 = vmatpush1.msra.mxu0 %v250
      %329 = vmatprep.subr.mxu0 0.0
      %330 = vmatpush1.msra.mxu0 %v251
      %331 = vmatprep.subr.mxu0 0.0
      %332 = vmatpush1.msra.mxu0 %v252
      %333 = vmatprep.subr.mxu0 0.0
      %334 = vmatpush1.msra.mxu0 %v253
      %335 = vmatprep.subr.mxu0 0.0
      %336 = vmatpush1.msra.mxu0 %v254
      %337 = vmatprep.subr.mxu0 0.0
      %338 = vmatpush1.msra.mxu0 %v255
      %339 = vmatprep.subr.mxu0 0.0
      %340 = vmatpush1.msra.mxu0 %v256
      %341 = vmatprep.subr.mxu0 0.0
      %342 = vmatpush1.msra.mxu0 %v257
      %343 = vmatprep.mubr.f32.mxu0 %v224
      %344 = vmatmul.mubr.f32.gmra.mrb[0].mxu0 %v223
      %v345 = vpop.f32.mrb[0].mxu0
      %v346 = vadd.f32 %v269, %v345
      %v347 = vpop.f32.mrb[0].mxu0
      %348 = vdwg.mxu0
      %349 = vmatprep.subr.mxu0 0.0
      %350 = vmatpush1.msra.mxu0 %v258
      %351 = vmatprep.subr.mxu0 0.0
      %352 = vmatpush1.msra.mxu0 %v259
      %353 = vmatprep.subr.mxu0 0.0
      %354 = vmatpush1.msra.mxu0 %v260
      %355 = vmatprep.subr.mxu0 0.0
      %356 = vmatpush1.msra.mxu0 %v261
      %357 = vmatprep.subr.mxu0 0.0
      %358 = vmatpush1.msra.mxu0 %v262
      %359 = vmatprep.subr.mxu0 0.0
      %360 = vmatpush1.msra.mxu0 %v277
      %361 = vmatprep.subr.mxu0 0.0
      %362 = vmatpush1.msra.mxu0 0.0
      %363 = vmatprep.subr.mxu0 0.0
      %364 = vmatpush1.msra.mxu0 0.0
      %365 = vmatprep.subr.mxu0 0.0
      %366 = vmatpush1.msra.mxu0 0.0
      %367 = vmatprep.subr.mxu0 0.0
      %368 = vmatpush1.msra.mxu0 0.0
      %369 = vmatprep.subr.mxu0 0.0
      %370 = vmatpush1.msra.mxu0 0.0
      %371 = vmatprep.subr.mxu0 0.0
      %372 = vmatpush1.msra.mxu0 0.0
      %373 = vmatprep.subr.mxu0 0.0
      %374 = vmatpush1.msra.mxu0 0.0
      %375 = vmatprep.subr.mxu0 0.0
      %376 = vmatpush1.msra.mxu0 0.0
      %377 = vmatprep.subr.mxu0 0.0
      %378 = vmatpush1.msra.mxu0 0.0
      %379 = vmatprep.subr.mxu0 0.0
      %380 = vmatpush1.msra.mxu0 0.0
      %381 = vmatprep.subr.mxu0 0.0
      %382 = vmatpush1.msra.mxu0 0.0
      %383 = vmatprep.subr.mxu0 0.0
      %384 = vmatpush1.msra.mxu0 0.0
      %385 = vmatprep.subr.mxu0 0.0
      %386 = vmatpush1.msra.mxu0 0.0
      %387 = vmatprep.subr.mxu0 0.0
      %388 = vmatpush1.msra.mxu0 0.0
      %389 = vmatprep.subr.mxu0 0.0
      %390 = vmatpush1.msra.mxu0 0.0
      %391 = vmatprep.subr.mxu0 0.0
      %392 = vmatpush1.msra.mxu0 0.0
      %393 = vmatprep.subr.mxu0 0.0
      %394 = vmatpush1.msra.mxu0 0.0
      %395 = vmatprep.subr.mxu0 0.0
      %396 = vmatpush1.msra.mxu0 0.0
      %397 = vmatprep.subr.mxu0 0.0
      %398 = vmatpush1.msra.mxu0 0.0
      %399 = vmatprep.subr.mxu0 0.0
      %400 = vmatpush1.msra.mxu0 0.0
      %401 = vmatprep.subr.mxu0 0.0
      %402 = vmatpush1.msra.mxu0 0.0
      %403 = vmatprep.subr.mxu0 0.0
      %404 = vmatpush1.msra.mxu0 0.0
      %405 = vmatprep.subr.mxu0 0.0
      %406 = vmatpush1.msra.mxu0 0.0
      %407 = vmatprep.subr.mxu0 0.0
      %408 = vmatpush1.msra.mxu0 0.0
      %409 = vmatprep.subr.mxu0 0.0
      %410 = vmatpush1.msra.mxu0 0.0
      %411 = vmatprep.subr.mxu0 0.0
      %412 = vmatpush1.msra.mxu0 0.0
      %413 = vmatprep.mubr.f32.mxu0 0.0
      %414 = vmatmul.mubr.f32.gmra.mrb[0].mxu0 %v273
      %v415 = vpop.f32.mrb[0].mxu0
      %v416 = vadd.f32 %v346, %v415
      %v417 = vpop.f32.mrb[0].mxu0
      %418 = vdwg.mxu0
      %v419 = vmax.f32 %v416, 0.0
      %v420 = vld [vmem:[%s3] sm:$0xff]
      %v421 = vld [vmem:[%s3 + $0x8] sm:$0xff]
      %v422 = vld [vmem:[%s3 + $0x10] sm:$0xff]
      %v423 = vld [vmem:[%s3 + $0x18] sm:$0xff]
      %v424 = vld [vmem:[%s3 + $0x20] sm:$0xff]
      %v425 = vld [vmem:[%s3 + $0x28] sm:$0xff]
      %v426 = vld [vmem:[%s3 + $0x30] sm:$0xff]
      %v427 = vld [vmem:[%s3 + $0x38] sm:$0xff]
      %v428 = vld [vmem:[%s4] sm:$0x1]
      %v430 = vlaneseq
      %v431 = vshrl.u32 %v430, 7
      %v432 = vsub.s32 0, %v431
      %v433 = vrot.slane %v428, %v432
      %vm435 = vcmask 523264
      %v437 = vsel %vm435, %v419, 0
      %439 = vmatprep.subr.mxu0 0.0
      %440 = vmatpush1.msra.mxu0 %v420
      %441 = vmatprep.subr.mxu0 0.0
      %442 = vmatpush1.msra.mxu0 %v421
      %443 = vmatprep.subr.mxu0 0.0
      %444 = vmatpush1.msra.mxu0 %v422
      %445 = vmatprep.subr.mxu0 0.0
      %446 = vmatpush1.msra.mxu0 %v423
      %447 = vmatprep.subr.mxu0 0.0
      %448 = vmatpush1.msra.mxu0 %v424
      %449 = vmatprep.subr.mxu0 0.0
      %450 = vmatpush1.msra.mxu0 %v425
      %451 = vmatprep.subr.mxu0 0.0
      %452 = vmatpush1.msra.mxu0 %v426
      %453 = vmatprep.subr.mxu0 0.0
      %454 = vmatpush1.msra.mxu0 %v427
      %455 = vmatprep.subr.mxu0 0.0
      %456 = vmatpush1.msra.mxu0 0.0
      %457 = vmatprep.subr.mxu0 0.0
      %458 = vmatpush1.msra.mxu0 0.0
      %459 = vmatprep.subr.mxu0 0.0
      %460 = vmatpush1.msra.mxu0 0.0
      %461 = vmatprep.subr.mxu0 0.0
      %462 = vmatpush1.msra.mxu0 0.0
      %463 = vmatprep.subr.mxu0 0.0
      %464 = vmatpush1.msra.mxu0 0.0
      %465 = vmatprep.subr.mxu0 0.0
      %466 = vmatpush1.msra.mxu0 0.0
      %467 = vmatprep.subr.mxu0 0.0
      %468 = vmatpush1.msra.mxu0 0.0
      %469 = vmatprep.subr.mxu0 0.0
      %470 = vmatpush1.msra.mxu0 0.0
      %471 = vmatprep.subr.mxu0 0.0
      %472 = vmatpush1.msra.mxu0 0.0
      %473 = vmatprep.subr.mxu0 0.0
      %474 = vmatpush1.msra.mxu0 0.0
      %475 = vmatprep.subr.mxu0 0.0
      %476 = vmatpush1.msra.mxu0 0.0
      %477 = vmatprep.subr.mxu0 0.0
      %478 = vmatpush1.msra.mxu0 0.0
      %479 = vmatprep.subr.mxu0 0.0
      %480 = vmatpush1.msra.mxu0 0.0
      %481 = vmatprep.subr.mxu0 0.0
      %482 = vmatpush1.msra.mxu0 0.0
      %483 = vmatprep.subr.mxu0 0.0
      %484 = vmatpush1.msra.mxu0 0.0
      %485 = vmatprep.subr.mxu0 0.0
      %486 = vmatpush1.msra.mxu0 0.0
      %487 = vmatprep.subr.mxu0 0.0
      %488 = vmatpush1.msra.mxu0 0.0
      %489 = vmatprep.subr.mxu0 0.0
      %490 = vmatpush1.msra.mxu0 0.0
      %491 = vmatprep.subr.mxu0 0.0
      %492 = vmatpush1.msra.mxu0 0.0
      %493 = vmatprep.subr.mxu0 0.0
      %494 = vmatpush1.msra.mxu0 0.0
      %495 = vmatprep.subr.mxu0 0.0
      %496 = vmatpush1.msra.mxu0 0.0
      %497 = vmatprep.subr.mxu0 0.0
      %498 = vmatpush1.msra.mxu0 0.0
      %499 = vmatprep.subr.mxu0 0.0
      %500 = vmatpush1.msra.mxu0 0.0
      %501 = vmatprep.subr.mxu0 0.0
      %502 = vmatpush1.msra.mxu0 0.0
      %503 = vmatprep.mubr.f32.mxu0 0.0
      %504 = vmatmul.mubr.f32.gmra.mrb[0].mxu0 %v437
      %v505 = vpop.f32.mrb[0].mxu0
      %v506 = vadd.f32 %v433, %v505
      %v507 = vpop.f32.mrb[0].mxu0
      %508 = vdwg.mxu0
      %vm509 = vcmask 15360
      %510 = vst.msk [vmem:[%s222] sm:$0xff] %vm509, %v506
      %p511 = scmp.lt.s32.totalorder %s16, 1
      %s512 = scalar_select %p511, %s16, 1
      %s513 = smul.addr %s512, 8
      %s514 = scalar_lea.vmem %s5, %s513
      // Predicated region
      $region41: #{tpu_custom_call.1} parent=39 // pred_check
        %p515 = pneg %p144
      $region42: #{tpu_custom_call.1} parent=39 // pred_check_branch
        %517 = sbr.rel (%p515) target = $region44
      $region43: #{tpu_custom_call.1} parent=39 // pred_region
        _
      $region44: #{tpu_custom_call.1} parent=39 // pred_fallthru
        _
    $region40: #{tpu_custom_call.1} parent=5 // pred_fallthru
      _
    %p518 = scmp.le.s32.totalorder 2, %s11
    // Predicated region
    $region45: #{tpu_custom_call.1} parent=5 // pred_check
      %p519 = pneg %p518
    $region46: #{tpu_custom_call.1} parent=5 // pred_check_branch
      %521 = sbr.rel (%p519) target = $region48
    $region47: #{tpu_custom_call.1} parent=5 // pred_region
      %s522 = ssub.s32 %s11, 2
      // Predicated region
      $region49: #{tpu_custom_call.1} parent=47 // pred_check
        %p523 = pneg %p150
      $region50: #{tpu_custom_call.1} parent=47 // pred_check_branch
        %525 = sbr.rel (%p523) target = $region52
      $region51: #{tpu_custom_call.1} parent=47 // pred_region
        %p526 = scmp.lt.s32.totalorder %s17, 1
        %s527 = scalar_select %p526, %s17, 1
        %s528 = smul.addr %s527, 8
        %s529 = scalar_lea.vmem %s5, %s528
      $region52: #{tpu_custom_call.1} parent=47 // pred_fallthru
        _
    $region48: #{tpu_custom_call.1} parent=5 // pred_fallthru
      _
  $region6: #{tpu_custom_call.1} parent=0 // loop_footer
    %s15 = sadd.s32 1, %s11
  $region7: #{tpu_custom_call.1} parent=0 // loop_footer_branch
    %10 = sbr.rel target = $region3
  $region8: #{tpu_custom_call.1} parent=0 // loop_exit
    _

</llo_original>
